<compile_context>
chip_gen: v6e
topology: v6e:2x2x1
jax: 0.10.0
libtpu: 0.0.40
codegen_flags: <defaults>
</compile_context>

<pallas_src>
import jax
import jax.numpy as jnp
import numpy as np
from jax.experimental import pallas as pl
from jax.experimental.pallas import tpu as pltpu

# ----- module constructor constants (helmholtz_loss_pde.__init__) -----
DX = 0.025
DY = 0.025
LB = 0.0
UB = 2.5
REGULARIZED = 1.0
PDE_LOSS_PENALTY = 0.0
V_BACKGROUND = 1.5 / 2.0          # module stores v_background / 2.0

# precomputed affine / reciprocal constants (no in-kernel divides by constants)
INV_DX2 = 1.0 / (DX * DX)
INV_DY2 = 1.0 / (DY * DY)
NORM_SCALE = 2.0 / (UB - LB)
NORM_SHIFT = -2.0 * LB / (UB - LB) - 1.0

H_HIDDEN = 32                     # hidden width of the synthetic `net` MLP (3 -> H -> 2)
MAX_TILE = 2048                   # points per grid step (lane-axis tile)


# ---------------------------------------------------------------------------
# One fused kernel: 5 MLP stencil queries + FD Laplacian + Helmholtz residual
# + per-point loss terms.  Everything channel-major, points on the lane axis.
# ---------------------------------------------------------------------------
def fused_helmholtz_kernel(omega_ref, data_ref, w1t_ref, b1_ref, w2t_ref, b2_ref, out_ref):
    omega = omega_ref[0, 0]
    om2 = omega * omega

    # packed per-point channels (points on lanes)
    x   = data_ref[0:1, :]        # (1, tn)
    y   = data_ref[1:2, :]
    sx  = data_ref[2:3, :]
    m   = data_ref[3:4, :]
    m0  = data_ref[4:5, :]
    u0  = data_ref[5:7, :]        # (2, tn) = [u0_real ; u0_imag]

    w1t = w1t_ref[...]            # (H, 3)
    b1  = b1_ref[...]             # (H, 1)
    w2t = w2t_ref[...]            # (2, H)
    b2  = b2_ref[...]             # (2, 1)

    wx = w1t[:, 0:1]              # (H, 1)
    wy = w1t[:, 1:2]
    ws = w1t[:, 2:3]

    # source-coordinate contribution is shared by all 5 stencil points
    s_term = ws * (sx * NORM_SCALE + NORM_SHIFT) + b1        # (H, tn)

    def query(xs, ys):
        # _query: net(embedding_fn(2*(cat(x,y,sx)-lb)/(ub-lb)-1)); embedding_fn = identity
        xn = xs * NORM_SCALE + NORM_SHIFT                    # (1, tn)
        yn = ys * NORM_SCALE + NORM_SHIFT
        h = jnp.tanh(wx * xn + wy * yn + s_term)             # (H, tn): VPU FMAs + EUP tanh
        # layer 2: lane-dense (2, tn) result
        return jnp.dot(w2t, h, preferred_element_type=jnp.float32) + b2

    u_c = query(x, y)             # center  == du_pred_out
    u_l = query(x - DX, y)        # left
    u_r = query(x + DX, y)        # right
    u_t = query(x, y - DY)        # top
    u_d = query(x, y + DY)        # down

    # self._laplace(u_left, u_right, u, u_top, u_down)
    lap = (u_l + u_r - 2.0 * u_c) * INV_DX2 + (u_t + u_d - 2.0 * u_c) * INV_DY2   # (2, tn)

    # Helmholtz residual (row 0 = real, row 1 = imag)
    f = om2 * m * u_c + lap + om2 * (m - m0) * u0            # (2, tn)

    # regloss factor: relu((vb*3.14/f)^2 - (sx-x)^2 - (y-0.025)^2) * 1e8 * f
    factor_d = jnp.maximum(
        (V_BACKGROUND * 3.14 / omega) ** 2 - (sx - x) ** 2 - (y - 0.025) ** 2, 0.0
    ) * 100000000.0 * omega                                  # (1, tn)

    sq_res = f[0:1, :] * f[0:1, :] + f[1:2, :] * f[1:2, :]                         # (1, tn)
    reg_term = factor_d * (u_c[0:1, :] * u_c[0:1, :] + u_c[1:2, :] * u_c[1:2, :])  # (1, tn)

    out_ref[0:2, :] = f
    out_ref[2:3, :] = sq_res
    out_ref[3:4, :] = reg_term


def helmholtz_forward(x, y, sx, omega, m, m0, u0r, u0i, w1, b1, w2, b2, *, tn=None):
    n = x.shape[0]
    hdim = w1.shape[1]

    if tn is None:
        tn = n if n <= MAX_TILE else MAX_TILE
    if n % tn != 0:
        raise ValueError("N must be divisible by the point tile size")
    num_tiles = n // tn
    if num_tiles > 1 and tn % 128 != 0:
        raise ValueError("multi-tile grids require a 128-aligned point tile")

    # one channel-major slab: points on the lane axis, channels on sublanes (padded to 8)
    data = jnp.stack(
        [x[:, 0], y[:, 0], sx[:, 0], m[:, 0], m0[:, 0], u0r[:, 0], u0i[:, 0],
         jnp.zeros((n,), jnp.float32)],
        axis=0,
    )                                                        # (8, N)

    w1t = w1.T                                               # (H, 3)
    b1c = b1.reshape(-1, 1)                                  # (H, 1)
    w2t = w2.T                                               # (2, H)
    b2c = b2.reshape(-1, 1)                                  # (2, 1)
    omega_s = jnp.asarray(omega, jnp.float32).reshape(1, 1)  # scalar -> SMEM

    out = pl.pallas_call(
        fused_helmholtz_kernel,
        out_shape=jax.ShapeDtypeStruct((4, n), jnp.float32),
        grid=(num_tiles,),
        in_specs=[
            pl.BlockSpec(memory_space=pltpu.MemorySpace.SMEM),   # omega (1,1) scalar
            pl.BlockSpec((8, tn), lambda i: (0, i)),             # packed point data
            pl.BlockSpec((hdim, 3), lambda i: (0, 0)),           # w1^T
            pl.BlockSpec((hdim, 1), lambda i: (0, 0)),           # b1
            pl.BlockSpec((2, hdim), lambda i: (0, 0)),           # w2^T
            pl.BlockSpec((2, 1), lambda i: (0, 0)),              # b2
        ],
        out_specs=pl.BlockSpec((4, tn), lambda i: (0, i)),
        compiler_params=pltpu.CompilerParams(dimension_semantics=("parallel",)),
    )(omega_s, data, w1t, b1c, w2t, b2c)

    f_r = out[0].reshape(n, 1)
    f_i = out[1].reshape(n, 1)
    loss_pde = jnp.sum(out[2]) / (n * 2)
    loss_reg = jnp.sum(out[3]) / (n * 2)
    pde_loss_pen = 0.0  # pde_loss_penelty == 0.0 branch
    total = loss_pde + REGULARIZED * loss_reg + PDE_LOSS_PENALTY * pde_loss_pen
    return total, loss_pde, loss_reg, f_r, f_i


run_model = jax.jit(helmholtz_forward)


# ---------------------------------------------------------------------------
# pure-JAX reference of the same fd / regularized branch (for a sanity check)
# ---------------------------------------------------------------------------
def reference_forward(x, y, sx, omega, m, m0, u0r, u0i, w1, b1, w2, b2):
    def query(xq, yq):
        xin = jnp.concatenate([xq, yq, sx], axis=1)
        xin = 2.0 * (xin - LB) / (UB - LB) - 1.0
        return jnp.tanh(xin @ w1 + b1) @ w2 + b2             # (N, 2)

    du = query(x, y)
    du_l, du_r = query(x - DX, y), query(x + DX, y)
    du_t, du_d = query(x, y - DY), query(x, y + DY)

    def lap(a, b, c, d, e):
        return (a + b - 2.0 * c) / DX ** 2 + (d + e - 2.0 * c) / DY ** 2

    lap_r = lap(du_l[:, 0:1], du_r[:, 0:1], du[:, 0:1], du_t[:, 0:1], du_d[:, 0:1])
    lap_i = lap(du_l[:, 1:2], du_r[:, 1:2], du[:, 1:2], du_t[:, 1:2], du_d[:, 1:2])
    f_r = omega ** 2 * m * du[:, 0:1] + lap_r + omega ** 2 * (m - m0) * u0r
    f_i = omega ** 2 * m * du[:, 1:2] + lap_i + omega ** 2 * (m - m0) * u0i
    factor_d = jnp.maximum(
        (V_BACKGROUND * 3.14 / omega) ** 2 - (sx - x) ** 2 - (y - 0.025) ** 2, 0.0
    ) * 100000000.0 * omega
    n = x.shape[0]
    loss_reg = (jnp.sum(factor_d * du[:, 0:1] ** 2) + jnp.sum(factor_d * du[:, 1:2] ** 2)) / (n * 2)
    loss_pde = (jnp.sum(f_r ** 2) + jnp.sum(f_i ** 2)) / (n * 2)
    total = loss_pde + REGULARIZED * loss_reg
    return total, loss_pde, loss_reg, f_r, f_i


if __name__ == "__main__":
    key = jax.random.PRNGKey(0)
    ks = jax.random.split(key, 11)
    N = 256

    x = jax.random.uniform(ks[0], (N, 1), jnp.float32, 0.1, 2.4)
    y = jax.random.uniform(ks[1], (N, 1), jnp.float32, 0.1, 2.4)
    sx = jax.random.uniform(ks[2], (N, 1), jnp.float32, 0.1, 2.4)
    m = jax.random.uniform(ks[3], (N, 1), jnp.float32, 0.2, 0.6)
    m0 = jax.random.uniform(ks[4], (N, 1), jnp.float32, 0.2, 0.6)
    u0r = jax.random.normal(ks[5], (N, 1), jnp.float32)
    u0i = jax.random.normal(ks[6], (N, 1), jnp.float32)

    # deterministic synthetic `net` parameters (embedding_fn = identity, net = MLP 3->32->2)
    w1 = 0.5 * jax.random.normal(ks[7], (3, H_HIDDEN), jnp.float32)
    b1 = 0.1 * jax.random.normal(ks[8], (1, H_HIDDEN), jnp.float32)
    w2 = 0.5 * jax.random.normal(ks[9], (H_HIDDEN, 2), jnp.float32)
    b2 = 0.1 * jax.random.normal(ks[10], (1, 2), jnp.float32)

    omega = jnp.float32(5.0)      # frequency f

    total, loss_pde, loss_reg, f_r, f_i = run_model(
        x, y, sx, omega, m, m0, u0r, u0i, w1, b1, w2, b2
    )
    jax.block_until_ready((total, loss_pde, loss_reg, f_r, f_i))
    assert f_r.shape == (N, 1) and f_i.shape == (N, 1)

    # sanity check against the pure-JAX reference (loose tolerance: fp reordering only)
    ref = reference_forward(x, y, sx, omega, m, m0, u0r, u0i, w1, b1, w2, b2)
    scale = float(jnp.max(jnp.abs(ref[3]))) + 1e-6
    np.testing.assert_allclose(np.asarray(f_r), np.asarray(ref[3]), rtol=5e-3, atol=5e-3 * scale)
    np.testing.assert_allclose(np.asarray(f_i), np.asarray(ref[4]), rtol=5e-3, atol=5e-3 * scale)
    np.testing.assert_allclose(float(total), float(ref[0]), rtol=5e-3)
    np.testing.assert_allclose(float(loss_pde), float(ref[1]), rtol=5e-3)
    np.testing.assert_allclose(float(loss_reg), float(ref[2]), rtol=5e-3)

    print("KERNEL_OK")
</pallas_src>

<mosaic_0001>
module attributes {stable_mosaic.version = 11 : i64} {
  func.func @fused_helmholtz_kernel(%arg0: i32, %arg1: memref<1x1xf32, #tpu.memory_space<smem>>, %arg2: memref<8x256xf32, #tpu.memory_space<vmem>>, %arg3: memref<32x3xf32, #tpu.memory_space<vmem>>, %arg4: memref<32x1xf32, #tpu.memory_space<vmem>>, %arg5: memref<2x32xf32, #tpu.memory_space<vmem>>, %arg6: memref<2x1xf32, #tpu.memory_space<vmem>>, %arg7: memref<4x256xf32, #tpu.memory_space<vmem>>) attributes {dimension_semantics = [#tpu.dimension_semantics<parallel>], iteration_bounds = array<i64: 1>, scalar_prefetch = 0 : i64, scratch_operands = 0 : i64, tpu.core_type = #tpu.core_type<tc>, window_params = [{transform_indices = @transform_0, window_bounds = array<i64: 1, 1>}, {transform_indices = @transform_1, window_bounds = array<i64: 8, 256>}, {pipeline_mode = #tpu.pipeline_mode<synchronous>, transform_indices = @transform_2, window_bounds = array<i64: 32, 3>}, {pipeline_mode = #tpu.pipeline_mode<synchronous>, transform_indices = @transform_3, window_bounds = array<i64: 32, 1>}, {pipeline_mode = #tpu.pipeline_mode<synchronous>, transform_indices = @transform_4, window_bounds = array<i64: 2, 32>}, {pipeline_mode = #tpu.pipeline_mode<synchronous>, transform_indices = @transform_5, window_bounds = array<i64: 2, 1>}, {transform_indices = @transform_6, window_bounds = array<i64: 4, 256>}]} {
    %c0 = arith.constant 0 : index
    %c0_0 = arith.constant 0 : index
    %0 = memref.load %arg1[%c0, %c0_0] : memref<1x1xf32, #tpu.memory_space<smem>>
    %1 = arith.mulf %0, %0 : f32
    %c0_1 = arith.constant 0 : index
    %c0_2 = arith.constant 0 : index
    %2 = vector.load %arg2[%c0_1, %c0_2] : memref<8x256xf32, #tpu.memory_space<vmem>>, vector<1x256xf32>
    %c1 = arith.constant 1 : index
    %c0_3 = arith.constant 0 : index
    %3 = vector.load %arg2[%c1, %c0_3] : memref<8x256xf32, #tpu.memory_space<vmem>>, vector<1x256xf32>
    %c2 = arith.constant 2 : index
    %c0_4 = arith.constant 0 : index
    %4 = vector.load %arg2[%c2, %c0_4] : memref<8x256xf32, #tpu.memory_space<vmem>>, vector<1x256xf32>
    %c3 = arith.constant 3 : index
    %c0_5 = arith.constant 0 : index
    %5 = vector.load %arg2[%c3, %c0_5] : memref<8x256xf32, #tpu.memory_space<vmem>>, vector<1x256xf32>
    %c4 = arith.constant 4 : index
    %c0_6 = arith.constant 0 : index
    %6 = vector.load %arg2[%c4, %c0_6] : memref<8x256xf32, #tpu.memory_space<vmem>>, vector<1x256xf32>
    %c5 = arith.constant 5 : index
    %c0_7 = arith.constant 0 : index
    %7 = vector.load %arg2[%c5, %c0_7] : memref<8x256xf32, #tpu.memory_space<vmem>>, vector<2x256xf32>
    %c0_8 = arith.constant 0 : index
    %c0_9 = arith.constant 0 : index
    %8 = vector.load %arg3[%c0_8, %c0_9] : memref<32x3xf32, #tpu.memory_space<vmem>>, vector<32x3xf32>
    %c0_10 = arith.constant 0 : index
    %c0_11 = arith.constant 0 : index
    %9 = vector.load %arg4[%c0_10, %c0_11] : memref<32x1xf32, #tpu.memory_space<vmem>>, vector<32x1xf32>
    %c0_12 = arith.constant 0 : index
    %c0_13 = arith.constant 0 : index
    %10 = vector.load %arg5[%c0_12, %c0_13] : memref<2x32xf32, #tpu.memory_space<vmem>>, vector<2x32xf32>
    %c0_14 = arith.constant 0 : index
    %c0_15 = arith.constant 0 : index
    %11 = vector.load %arg6[%c0_14, %c0_15] : memref<2x1xf32, #tpu.memory_space<vmem>>, vector<2x1xf32>
    %12 = vector.extract_strided_slice %8 {offsets = [0, 0], sizes = [32, 1], strides = [1, 1]} : vector<32x3xf32> to vector<32x1xf32>
    %13 = vector.extract_strided_slice %8 {offsets = [0, 1], sizes = [32, 1], strides = [1, 1]} : vector<32x3xf32> to vector<32x1xf32>
    %14 = vector.extract_strided_slice %8 {offsets = [0, 2], sizes = [32, 1], strides = [1, 1]} : vector<32x3xf32> to vector<32x1xf32>
    %cst = arith.constant 8.000000e-01 : f32
    %15 = vector.broadcast %cst : f32 to vector<1x256xf32>
    %16 = arith.mulf %4, %15 : vector<1x256xf32>
    %cst_16 = arith.constant -1.000000e+00 : f32
    %17 = vector.broadcast %cst_16 : f32 to vector<1x256xf32>
    %18 = arith.addf %16, %17 : vector<1x256xf32>
    %19 = vector.broadcast %14 : vector<32x1xf32> to vector<32x256xf32>
    %20 = vector.broadcast %18 : vector<1x256xf32> to vector<32x256xf32>
    %21 = arith.mulf %19, %20 : vector<32x256xf32>
    %22 = vector.broadcast %9 : vector<32x1xf32> to vector<32x256xf32>
    %23 = arith.addf %21, %22 : vector<32x256xf32>
    %cst_17 = arith.constant 8.000000e-01 : f32
    %24 = vector.broadcast %cst_17 : f32 to vector<1x256xf32>
    %25 = arith.mulf %2, %24 : vector<1x256xf32>
    %cst_18 = arith.constant -1.000000e+00 : f32
    %26 = vector.broadcast %cst_18 : f32 to vector<1x256xf32>
    %27 = arith.addf %25, %26 : vector<1x256xf32>
    %cst_19 = arith.constant 8.000000e-01 : f32
    %28 = vector.broadcast %cst_19 : f32 to vector<1x256xf32>
    %29 = arith.mulf %3, %28 : vector<1x256xf32>
    %cst_20 = arith.constant -1.000000e+00 : f32
    %30 = vector.broadcast %cst_20 : f32 to vector<1x256xf32>
    %31 = arith.addf %29, %30 : vector<1x256xf32>
    %32 = vector.broadcast %12 : vector<32x1xf32> to vector<32x256xf32>
    %33 = vector.broadcast %27 : vector<1x256xf32> to vector<32x256xf32>
    %34 = arith.mulf %32, %33 : vector<32x256xf32>
    %35 = vector.broadcast %13 : vector<32x1xf32> to vector<32x256xf32>
    %36 = vector.broadcast %31 : vector<1x256xf32> to vector<32x256xf32>
    %37 = arith.mulf %35, %36 : vector<32x256xf32>
    %38 = arith.addf %34, %37 : vector<32x256xf32>
    %39 = arith.addf %38, %23 : vector<32x256xf32>
    %40 = math.tanh %39 : vector<32x256xf32>
    %cst_21 = arith.constant dense<0.000000e+00> : vector<2x256xf32>
    %41 = tpu.matmul %10, %40, %cst_21 {dimension_numbers = #tpu.dot_dimension_numbers<[1], [0], [0], [1], [0, 0, 1, 1], [], []>} : vector<2x32xf32>, vector<32x256xf32>, vector<2x256xf32> -> vector<2x256xf32>
    %42 = vector.broadcast %11 : vector<2x1xf32> to vector<2x256xf32>
    %43 = arith.addf %41, %42 : vector<2x256xf32>
    %cst_22 = arith.constant 2.500000e-02 : f32
    %44 = vector.broadcast %cst_22 : f32 to vector<1x256xf32>
    %45 = arith.subf %2, %44 : vector<1x256xf32>
    %cst_23 = arith.constant 8.000000e-01 : f32
    %46 = vector.broadcast %cst_23 : f32 to vector<1x256xf32>
    %47 = arith.mulf %45, %46 : vector<1x256xf32>
    %cst_24 = arith.constant -1.000000e+00 : f32
    %48 = vector.broadcast %cst_24 : f32 to vector<1x256xf32>
    %49 = arith.addf %47, %48 : vector<1x256xf32>
    %cst_25 = arith.constant 8.000000e-01 : f32
    %50 = vector.broadcast %cst_25 : f32 to vector<1x256xf32>
    %51 = arith.mulf %3, %50 : vector<1x256xf32>
    %cst_26 = arith.constant -1.000000e+00 : f32
    %52 = vector.broadcast %cst_26 : f32 to vector<1x256xf32>
    %53 = arith.addf %51, %52 : vector<1x256xf32>
    %54 = vector.broadcast %12 : vector<32x1xf32> to vector<32x256xf32>
    %55 = vector.broadcast %49 : vector<1x256xf32> to vector<32x256xf32>
    %56 = arith.mulf %54, %55 : vector<32x256xf32>
    %57 = vector.broadcast %13 : vector<32x1xf32> to vector<32x256xf32>
    %58 = vector.broadcast %53 : vector<1x256xf32> to vector<32x256xf32>
    %59 = arith.mulf %57, %58 : vector<32x256xf32>
    %60 = arith.addf %56, %59 : vector<32x256xf32>
    %61 = arith.addf %60, %23 : vector<32x256xf32>
    %62 = math.tanh %61 : vector<32x256xf32>
    %cst_27 = arith.constant dense<0.000000e+00> : vector<2x256xf32>
    %63 = tpu.matmul %10, %62, %cst_27 {dimension_numbers = #tpu.dot_dimension_numbers<[1], [0], [0], [1], [0, 0, 1, 1], [], []>} : vector<2x32xf32>, vector<32x256xf32>, vector<2x256xf32> -> vector<2x256xf32>
    %64 = vector.broadcast %11 : vector<2x1xf32> to vector<2x256xf32>
    %65 = arith.addf %63, %64 : vector<2x256xf32>
    %cst_28 = arith.constant 2.500000e-02 : f32
    %66 = vector.broadcast %cst_28 : f32 to vector<1x256xf32>
    %67 = arith.addf %2, %66 : vector<1x256xf32>
    %cst_29 = arith.constant 8.000000e-01 : f32
    %68 = vector.broadcast %cst_29 : f32 to vector<1x256xf32>
    %69 = arith.mulf %67, %68 : vector<1x256xf32>
    %cst_30 = arith.constant -1.000000e+00 : f32
    %70 = vector.broadcast %cst_30 : f32 to vector<1x256xf32>
    %71 = arith.addf %69, %70 : vector<1x256xf32>
    %cst_31 = arith.constant 8.000000e-01 : f32
    %72 = vector.broadcast %cst_31 : f32 to vector<1x256xf32>
    %73 = arith.mulf %3, %72 : vector<1x256xf32>
    %cst_32 = arith.constant -1.000000e+00 : f32
    %74 = vector.broadcast %cst_32 : f32 to vector<1x256xf32>
    %75 = arith.addf %73, %74 : vector<1x256xf32>
    %76 = vector.broadcast %12 : vector<32x1xf32> to vector<32x256xf32>
    %77 = vector.broadcast %71 : vector<1x256xf32> to vector<32x256xf32>
    %78 = arith.mulf %76, %77 : vector<32x256xf32>
    %79 = vector.broadcast %13 : vector<32x1xf32> to vector<32x256xf32>
    %80 = vector.broadcast %75 : vector<1x256xf32> to vector<32x256xf32>
    %81 = arith.mulf %79, %80 : vector<32x256xf32>
    %82 = arith.addf %78, %81 : vector<32x256xf32>
    %83 = arith.addf %82, %23 : vector<32x256xf32>
    %84 = math.tanh %83 : vector<32x256xf32>
    %cst_33 = arith.constant dense<0.000000e+00> : vector<2x256xf32>
    %85 = tpu.matmul %10, %84, %cst_33 {dimension_numbers = #tpu.dot_dimension_numbers<[1], [0], [0], [1], [0, 0, 1, 1], [], []>} : vector<2x32xf32>, vector<32x256xf32>, vector<2x256xf32> -> vector<2x256xf32>
    %86 = vector.broadcast %11 : vector<2x1xf32> to vector<2x256xf32>
    %87 = arith.addf %85, %86 : vector<2x256xf32>
    %cst_34 = arith.constant 2.500000e-02 : f32
    %88 = vector.broadcast %cst_34 : f32 to vector<1x256xf32>
    %89 = arith.subf %3, %88 : vector<1x256xf32>
    %cst_35 = arith.constant 8.000000e-01 : f32
    %90 = vector.broadcast %cst_35 : f32 to vector<1x256xf32>
    %91 = arith.mulf %2, %90 : vector<1x256xf32>
    %cst_36 = arith.constant -1.000000e+00 : f32
    %92 = vector.broadcast %cst_36 : f32 to vector<1x256xf32>
    %93 = arith.addf %91, %92 : vector<1x256xf32>
    %cst_37 = arith.constant 8.000000e-01 : f32
    %94 = vector.broadcast %cst_37 : f32 to vector<1x256xf32>
    %95 = arith.mulf %89, %94 : vector<1x256xf32>
    %cst_38 = arith.constant -1.000000e+00 : f32
    %96 = vector.broadcast %cst_38 : f32 to vector<1x256xf32>
    %97 = arith.addf %95, %96 : vector<1x256xf32>
    %98 = vector.broadcast %12 : vector<32x1xf32> to vector<32x256xf32>
    %99 = vector.broadcast %93 : vector<1x256xf32> to vector<32x256xf32>
    %100 = arith.mulf %98, %99 : vector<32x256xf32>
    %101 = vector.broadcast %13 : vector<32x1xf32> to vector<32x256xf32>
    %102 = vector.broadcast %97 : vector<1x256xf32> to vector<32x256xf32>
    %103 = arith.mulf %101, %102 : vector<32x256xf32>
    %104 = arith.addf %100, %103 : vector<32x256xf32>
    %105 = arith.addf %104, %23 : vector<32x256xf32>
    %106 = math.tanh %105 : vector<32x256xf32>
    %cst_39 = arith.constant dense<0.000000e+00> : vector<2x256xf32>
    %107 = tpu.matmul %10, %106, %cst_39 {dimension_numbers = #tpu.dot_dimension_numbers<[1], [0], [0], [1], [0, 0, 1, 1], [], []>} : vector<2x32xf32>, vector<32x256xf32>, vector<2x256xf32> -> vector<2x256xf32>
    %108 = vector.broadcast %11 : vector<2x1xf32> to vector<2x256xf32>
    %109 = arith.addf %107, %108 : vector<2x256xf32>
    %cst_40 = arith.constant 2.500000e-02 : f32
    %110 = vector.broadcast %cst_40 : f32 to vector<1x256xf32>
    %111 = arith.addf %3, %110 : vector<1x256xf32>
    %cst_41 = arith.constant 8.000000e-01 : f32
    %112 = vector.broadcast %cst_41 : f32 to vector<1x256xf32>
    %113 = arith.mulf %2, %112 : vector<1x256xf32>
    %cst_42 = arith.constant -1.000000e+00 : f32
    %114 = vector.broadcast %cst_42 : f32 to vector<1x256xf32>
    %115 = arith.addf %113, %114 : vector<1x256xf32>
    %cst_43 = arith.constant 8.000000e-01 : f32
    %116 = vector.broadcast %cst_43 : f32 to vector<1x256xf32>
    %117 = arith.mulf %111, %116 : vector<1x256xf32>
    %cst_44 = arith.constant -1.000000e+00 : f32
    %118 = vector.broadcast %cst_44 : f32 to vector<1x256xf32>
    %119 = arith.addf %117, %118 : vector<1x256xf32>
    %120 = vector.broadcast %12 : vector<32x1xf32> to vector<32x256xf32>
    %121 = vector.broadcast %115 : vector<1x256xf32> to vector<32x256xf32>
    %122 = arith.mulf %120, %121 : vector<32x256xf32>
    %123 = vector.broadcast %13 : vector<32x1xf32> to vector<32x256xf32>
    %124 = vector.broadcast %119 : vector<1x256xf32> to vector<32x256xf32>
    %125 = arith.mulf %123, %124 : vector<32x256xf32>
    %126 = arith.addf %122, %125 : vector<32x256xf32>
    %127 = arith.addf %126, %23 : vector<32x256xf32>
    %128 = math.tanh %127 : vector<32x256xf32>
    %cst_45 = arith.constant dense<0.000000e+00> : vector<2x256xf32>
    %129 = tpu.matmul %10, %128, %cst_45 {dimension_numbers = #tpu.dot_dimension_numbers<[1], [0], [0], [1], [0, 0, 1, 1], [], []>} : vector<2x32xf32>, vector<32x256xf32>, vector<2x256xf32> -> vector<2x256xf32>
    %130 = vector.broadcast %11 : vector<2x1xf32> to vector<2x256xf32>
    %131 = arith.addf %129, %130 : vector<2x256xf32>
    %132 = arith.addf %65, %87 : vector<2x256xf32>
    %cst_46 = arith.constant 2.000000e+00 : f32
    %133 = vector.broadcast %cst_46 : f32 to vector<2x256xf32>
    %134 = arith.mulf %133, %43 : vector<2x256xf32>
    %135 = arith.subf %132, %134 : vector<2x256xf32>
    %cst_47 = arith.constant 1.600000e+03 : f32
    %136 = vector.broadcast %cst_47 : f32 to vector<2x256xf32>
    %137 = arith.mulf %135, %136 : vector<2x256xf32>
    %138 = arith.addf %109, %131 : vector<2x256xf32>
    %cst_48 = arith.constant 2.000000e+00 : f32
    %139 = vector.broadcast %cst_48 : f32 to vector<2x256xf32>
    %140 = arith.mulf %139, %43 : vector<2x256xf32>
    %141 = arith.subf %138, %140 : vector<2x256xf32>
    %cst_49 = arith.constant 1.600000e+03 : f32
    %142 = vector.broadcast %cst_49 : f32 to vector<2x256xf32>
    %143 = arith.mulf %141, %142 : vector<2x256xf32>
    %144 = arith.addf %137, %143 : vector<2x256xf32>
    %145 = vector.broadcast %1 : f32 to vector<1x256xf32>
    %146 = arith.mulf %145, %5 : vector<1x256xf32>
    %147 = vector.broadcast %146 : vector<1x256xf32> to vector<2x256xf32>
    %148 = arith.mulf %147, %43 : vector<2x256xf32>
    %149 = arith.addf %148, %144 : vector<2x256xf32>
    %150 = arith.subf %5, %6 : vector<1x256xf32>
    %151 = vector.broadcast %1 : f32 to vector<1x256xf32>
    %152 = arith.mulf %151, %150 : vector<1x256xf32>
    %153 = vector.broadcast %152 : vector<1x256xf32> to vector<2x256xf32>
    %154 = arith.mulf %153, %7 : vector<2x256xf32>
    %155 = arith.addf %149, %154 : vector<2x256xf32>
    %cst_50 = arith.constant 2.355000e+00 : f32
    %156 = arith.divf %cst_50, %0 : f32
    %157 = arith.mulf %156, %156 : f32
    %158 = arith.subf %4, %2 : vector<1x256xf32>
    %159 = arith.mulf %158, %158 : vector<1x256xf32>
    %160 = vector.broadcast %157 : f32 to vector<1x256xf32>
    %161 = arith.subf %160, %159 : vector<1x256xf32>
    %cst_51 = arith.constant 2.500000e-02 : f32
    %162 = vector.broadcast %cst_51 : f32 to vector<1x256xf32>
    %163 = arith.subf %3, %162 : vector<1x256xf32>
    %164 = arith.mulf %163, %163 : vector<1x256xf32>
    %165 = arith.subf %161, %164 : vector<1x256xf32>
    %cst_52 = arith.constant 0.000000e+00 : f32
    %166 = vector.broadcast %cst_52 : f32 to vector<1x256xf32>
    %167 = arith.maximumf %165, %166 : vector<1x256xf32>
    %cst_53 = arith.constant 1.000000e+08 : f32
    %168 = vector.broadcast %cst_53 : f32 to vector<1x256xf32>
    %169 = arith.mulf %167, %168 : vector<1x256xf32>
    %170 = vector.broadcast %0 : f32 to vector<1x256xf32>
    %171 = arith.mulf %169, %170 : vector<1x256xf32>
    %172 = vector.extract_strided_slice %155 {offsets = [0, 0], sizes = [1, 256], strides = [1, 1]} : vector<2x256xf32> to vector<1x256xf32>
    %173 = vector.extract_strided_slice %155 {offsets = [0, 0], sizes = [1, 256], strides = [1, 1]} : vector<2x256xf32> to vector<1x256xf32>
    %174 = arith.mulf %172, %173 : vector<1x256xf32>
    %175 = vector.extract_strided_slice %155 {offsets = [1, 0], sizes = [1, 256], strides = [1, 1]} : vector<2x256xf32> to vector<1x256xf32>
    %176 = vector.extract_strided_slice %155 {offsets = [1, 0], sizes = [1, 256], strides = [1, 1]} : vector<2x256xf32> to vector<1x256xf32>
    %177 = arith.mulf %175, %176 : vector<1x256xf32>
    %178 = arith.addf %174, %177 : vector<1x256xf32>
    %179 = vector.extract_strided_slice %43 {offsets = [0, 0], sizes = [1, 256], strides = [1, 1]} : vector<2x256xf32> to vector<1x256xf32>
    %180 = vector.extract_strided_slice %43 {offsets = [0, 0], sizes = [1, 256], strides = [1, 1]} : vector<2x256xf32> to vector<1x256xf32>
    %181 = arith.mulf %179, %180 : vector<1x256xf32>
    %182 = vector.extract_strided_slice %43 {offsets = [1, 0], sizes = [1, 256], strides = [1, 1]} : vector<2x256xf32> to vector<1x256xf32>
    %183 = vector.extract_strided_slice %43 {offsets = [1, 0], sizes = [1, 256], strides = [1, 1]} : vector<2x256xf32> to vector<1x256xf32>
    %184 = arith.mulf %182, %183 : vector<1x256xf32>
    %185 = arith.addf %181, %184 : vector<1x256xf32>
    %186 = arith.mulf %171, %185 : vector<1x256xf32>
    %c0_54 = arith.constant 0 : index
    %c0_55 = arith.constant 0 : index
    %187 = vector.load %arg7[%c0_54, %c0_55] : memref<4x256xf32, #tpu.memory_space<vmem>>, vector<2x256xf32>
    tpu.vector_store %arg7[%c0_54, %c0_55], %155 {strides = array<i32>} : memref<4x256xf32, #tpu.memory_space<vmem>>, vector<2x256xf32>,
    %c2_56 = arith.constant 2 : index
    %c0_57 = arith.constant 0 : index
    %188 = vector.load %arg7[%c2_56, %c0_57] : memref<4x256xf32, #tpu.memory_space<vmem>>, vector<1x256xf32>
    tpu.vector_store %arg7[%c2_56, %c0_57], %178 {strides = array<i32>} : memref<4x256xf32, #tpu.memory_space<vmem>>, vector<1x256xf32>,
    %c3_58 = arith.constant 3 : index
    %c0_59 = arith.constant 0 : index
    %189 = vector.load %arg7[%c3_58, %c0_59] : memref<4x256xf32, #tpu.memory_space<vmem>>, vector<1x256xf32>
    tpu.vector_store %arg7[%c3_58, %c0_59], %186 {strides = array<i32>} : memref<4x256xf32, #tpu.memory_space<vmem>>, vector<1x256xf32>,
    return
  }
  func.func @transform_0(%arg0: i32) -> (i32, i32) {
    %c0_i32 = arith.constant 0 : i32
    %c0_i32_0 = arith.constant 0 : i32
    %c0_i32_1 = arith.constant 0 : i32
    return %c0_i32, %c0_i32_0 : i32, i32
  }
  func.func @transform_1(%arg0: i32) -> (i32, i32) {
    %c0_i32 = arith.constant 0 : i32
    %c0_i32_0 = arith.constant 0 : i32
    return %c0_i32, %arg0 : i32, i32
  }
  func.func @transform_2(%arg0: i32) -> (i32, i32) {
    %c0_i32 = arith.constant 0 : i32
    %c0_i32_0 = arith.constant 0 : i32
    %c0_i32_1 = arith.constant 0 : i32
    return %c0_i32, %c0_i32_0 : i32, i32
  }
  func.func @transform_3(%arg0: i32) -> (i32, i32) {
    %c0_i32 = arith.constant 0 : i32
    %c0_i32_0 = arith.constant 0 : i32
    %c0_i32_1 = arith.constant 0 : i32
    return %c0_i32, %c0_i32_0 : i32, i32
  }
  func.func @transform_4(%arg0: i32) -> (i32, i32) {
    %c0_i32 = arith.constant 0 : i32
    %c0_i32_0 = arith.constant 0 : i32
    %c0_i32_1 = arith.constant 0 : i32
    return %c0_i32, %c0_i32_0 : i32, i32
  }
  func.func @transform_5(%arg0: i32) -> (i32, i32) {
    %c0_i32 = arith.constant 0 : i32
    %c0_i32_0 = arith.constant 0 : i32
    %c0_i32_1 = arith.constant 0 : i32
    return %c0_i32, %c0_i32_0 : i32, i32
  }
  func.func @transform_6(%arg0: i32) -> (i32, i32) {
    %c0_i32 = arith.constant 0 : i32
    %c0_i32_0 = arith.constant 0 : i32
    return %c0_i32, %arg0 : i32, i32
  }
}

</mosaic_0001>

<llo_original>
// kernel: helmholtz_forward.1
$region0: #{helmholtz_forward.1}
  #allocation0 [shape = 'u32[]', space=smem, size = 0x4, offset = 0x4, fixed_abs, tag = 'smem constant byte address 0x4 - core index']
  #allocation1 [shape = 'u32[144,128]{1,0:T(1,128)}', space=vmem, size = 0x12000, scoped, tag = 'internal scratch']
  #allocation2 [shape = 'f32[1,1]{1,0:T(1,128)S(6)}', space=smem, size = 0x200, scoped, tag = 'scoped memory for helmholtz_forward.1']
  %s0 = inlined_call_operand.<no memory space> [shape: f32[1,1], index: 0, kind: input, shape index: {}]
  %s1 = inlined_call_operand.vmem [shape: f32[8,256], index: 1, kind: input, shape index: {}]
  %s2 = inlined_call_operand.vmem [shape: f32[32,3], index: 2, kind: input, shape index: {}]
  %s3 = inlined_call_operand.vmem [shape: f32[32,1], index: 3, kind: input, shape index: {}]
  %s4 = inlined_call_operand.vmem [shape: f32[2,32], index: 4, kind: input, shape index: {}]
  %s5 = inlined_call_operand.vmem [shape: f32[2,1], index: 5, kind: input, shape index: {}]
  %s6 = inlined_call_operand.vmem [shape: f32[4,256], index: 6, kind: output, shape index: {}]
  %s7 = sld [smem:[#allocation0]]
  $region34: #{helmholtz_forward.1} parent=0
    _
  %s9 = ssub.s32 1, %s7
  %s10 = scalar_select 0, %s9, %s7
  %11 = sst [smem:[#allocation2]] %s0
  // Predicated region
  $region2: #{helmholtz_forward.1} parent=0 // pred_check
    _
  $region3: #{helmholtz_forward.1} parent=0 // pred_check_branch
    %13 = sbr.rel (0) target = $region5
  $region4: #{helmholtz_forward.1} parent=0 // pred_region
    _
  $region5: #{helmholtz_forward.1} parent=0 // pred_fallthru
    _
  // Predicated region
  $region6: #{helmholtz_forward.1} parent=0 // pred_check
    _
  $region7: #{helmholtz_forward.1} parent=0 // pred_check_branch
    %15 = sbr.rel (0) target = $region9
  $region8: #{helmholtz_forward.1} parent=0 // pred_region
    _
  $region9: #{helmholtz_forward.1} parent=0 // pred_fallthru
    _
  // Predicated region
  $region10: #{helmholtz_forward.1} parent=0 // pred_check
    _
  $region11: #{helmholtz_forward.1} parent=0 // pred_check_branch
    %17 = sbr.rel (0) target = $region13
  $region12: #{helmholtz_forward.1} parent=0 // pred_region
    _
  $region13: #{helmholtz_forward.1} parent=0 // pred_fallthru
    _
  // Predicated region
  $region14: #{helmholtz_forward.1} parent=0 // pred_check
    _
  $region15: #{helmholtz_forward.1} parent=0 // pred_check_branch
    %19 = sbr.rel (0) target = $region17
  $region16: #{helmholtz_forward.1} parent=0 // pred_region
    _
  $region17: #{helmholtz_forward.1} parent=0 // pred_fallthru
    _
  // Predicated region
  $region18: #{helmholtz_forward.1} parent=0 // pred_check
    _
  $region19: #{helmholtz_forward.1} parent=0 // pred_check_branch
    %21 = sbr.rel (0) target = $region21
  $region20: #{helmholtz_forward.1} parent=0 // pred_region
    _
  $region21: #{helmholtz_forward.1} parent=0 // pred_fallthru
    _
  // Predicated region
  $region22: #{helmholtz_forward.1} parent=0 // pred_check
    _
  $region23: #{helmholtz_forward.1} parent=0 // pred_check_branch
    %23 = sbr.rel (0) target = $region25
  $region24: #{helmholtz_forward.1} parent=0 // pred_region
    _
  $region25: #{helmholtz_forward.1} parent=0 // pred_fallthru
    _
  %s24 = sld [smem:[#allocation2]]
  %s25 = smul.f32 %s24, %s24
  %v26 = vld [vmem:[%s1] ss:$8 sm:$0x3]
  %s27 = scalar_lea.vmem %s1, 1
  %v28 = vld [vmem:[%s27] ss:$8 sm:$0x3]
  %s29 = scalar_lea.vmem %s1, 2
  %v30 = vld [vmem:[%s29] ss:$8 sm:$0x3]
  %s31 = scalar_lea.vmem %s1, 3
  %v32 = vld [vmem:[%s31] ss:$8 sm:$0x3]
  %s33 = scalar_lea.vmem %s1, 4
  %v34 = vld [vmem:[%s33] ss:$8 sm:$0x3]
  %v35 = vld [vmem:[%s1] sm:$0x60]
  %v36 = vld [vmem:[%s1 + $0x8] sm:$0x60]
  %v37 = vld [vmem:[%s2] sm:$0xff]
  %v38 = vld [vmem:[%s2 + $0x8] sm:$0xff]
  %v39 = vld [vmem:[%s2 + $0x10] sm:$0xff]
  %v40 = vld [vmem:[%s2 + $0x18] sm:$0xff]
  %v41 = vld [vmem:[%s3] sm:$0xff]
  %v42 = vld [vmem:[%s3 + $0x8] sm:$0xff]
  %v43 = vld [vmem:[%s3 + $0x10] sm:$0xff]
  %v44 = vld [vmem:[%s3 + $0x18] sm:$0xff]
  %v45 = vld [vmem:[%s4] sm:$0x3]
  %v46 = vld [vmem:[%s5] sm:$0x3]
  %v47 = vmul.f32 %v30, 0.8
  %v48 = vadd.f32 %v47, -1.0
  %50 = vset.pattern.permute.xlu0 2
  %51 = vperm.xlu0 %50, %v37
  %v52 = vpop.permute.xlu0 %51
  %55 = vset.pattern.permute.xlu0 2
  %56 = vperm.xlu0 %55, %v38
  %v57 = vpop.permute.xlu0 %56
  %60 = vset.pattern.permute.xlu0 2
  %61 = vperm.xlu0 %60, %v39
  %v62 = vpop.permute.xlu0 %61
  %65 = vset.pattern.permute.xlu0 2
  %66 = vperm.xlu0 %65, %v40
  %v67 = vpop.permute.xlu0 %66
  %v70 = vlaneseq
  %v71 = vshrl.u32 %v70, 7
  %v72 = vsub.s32 0, %v71
  %v73 = vrot.slane %v48, %v72
  %v74 = vlaneseq
  %v75 = vshrl.u32 %v74, 7
  %v76 = vsub.s32 1, %v75
  %v77 = vrot.slane %v48, %v76
  %v80 = vmul.f32 %v52, %v73
  %v81 = vmul.f32 %v52, %v77
  %v82 = vmul.f32 %v57, %v73
  %v83 = vmul.f32 %v57, %v77
  %v84 = vmul.f32 %v62, %v73
  %v85 = vmul.f32 %v62, %v77
  %v86 = vmul.f32 %v67, %v73
  %v87 = vmul.f32 %v67, %v77
  %89 = vset.pattern.permute.xlu0 0
  %90 = vperm.xlu0 %89, %v41
  %v91 = vpop.permute.xlu0 %90
  %94 = vset.pattern.permute.xlu0 0
  %95 = vperm.xlu0 %94, %v42
  %v96 = vpop.permute.xlu0 %95
  %99 = vset.pattern.permute.xlu0 0
  %100 = vperm.xlu0 %99, %v43
  %v101 = vpop.permute.xlu0 %100
  %104 = vset.pattern.permute.xlu0 0
  %105 = vperm.xlu0 %104, %v44
  %v106 = vpop.permute.xlu0 %105
  %v108 = vadd.f32 %v80, %v91
  %v109 = vadd.f32 %v81, %v91
  %v110 = vadd.f32 %v82, %v96
  %v111 = vadd.f32 %v83, %v96
  %v112 = vadd.f32 %v84, %v101
  %v113 = vadd.f32 %v85, %v101
  %v114 = vadd.f32 %v86, %v106
  %v115 = vadd.f32 %v87, %v106
  %v116 = vmul.f32 %v26, 0.8
  %v117 = vadd.f32 %v116, -1.0
  %v118 = vmul.f32 %v28, 0.8
  %v119 = vadd.f32 %v118, -1.0
  %120 = vset.pattern.permute.xlu0 0
  %121 = vperm.xlu0 %120, %v37
  %v122 = vpop.permute.xlu0 %121
  %124 = vset.pattern.permute.xlu0 0
  %125 = vperm.xlu0 %124, %v38
  %v126 = vpop.permute.xlu0 %125
  %128 = vset.pattern.permute.xlu0 0
  %129 = vperm.xlu0 %128, %v39
  %v130 = vpop.permute.xlu0 %129
  %132 = vset.pattern.permute.xlu0 0
  %133 = vperm.xlu0 %132, %v40
  %v134 = vpop.permute.xlu0 %133
  %v137 = vlaneseq
  %v138 = vshrl.u32 %v137, 7
  %v139 = vsub.s32 0, %v138
  %v140 = vrot.slane %v117, %v139
  %v141 = vlaneseq
  %v142 = vshrl.u32 %v141, 7
  %v143 = vsub.s32 1, %v142
  %v144 = vrot.slane %v117, %v143
  %v147 = vmul.f32 %v122, %v140
  %v148 = vmul.f32 %v122, %v144
  %v149 = vmul.f32 %v126, %v140
  %v150 = vmul.f32 %v126, %v144
  %v151 = vmul.f32 %v130, %v140
  %v152 = vmul.f32 %v130, %v144
  %v153 = vmul.f32 %v134, %v140
  %v154 = vmul.f32 %v134, %v144
  %155 = vset.pattern.permute.xlu0 1
  %156 = vperm.xlu0 %155, %v37
  %v157 = vpop.permute.xlu0 %156
  %159 = vset.pattern.permute.xlu0 1
  %160 = vperm.xlu0 %159, %v38
  %v161 = vpop.permute.xlu0 %160
  %163 = vset.pattern.permute.xlu0 1
  %164 = vperm.xlu0 %163, %v39
  %v165 = vpop.permute.xlu0 %164
  %167 = vset.pattern.permute.xlu0 1
  %168 = vperm.xlu0 %167, %v40
  %v169 = vpop.permute.xlu0 %168
  %v172 = vlaneseq
  %v173 = vshrl.u32 %v172, 7
  %v174 = vsub.s32 0, %v173
  %v175 = vrot.slane %v119, %v174
  %v176 = vlaneseq
  %v177 = vshrl.u32 %v176, 7
  %v178 = vsub.s32 1, %v177
  %v179 = vrot.slane %v119, %v178
  %v182 = vmul.f32 %v157, %v175
  %v183 = vmul.f32 %v157, %v179
  %v184 = vmul.f32 %v161, %v175
  %v185 = vmul.f32 %v161, %v179
  %v186 = vmul.f32 %v165, %v175
  %v187 = vmul.f32 %v165, %v179
  %v188 = vmul.f32 %v169, %v175
  %v189 = vmul.f32 %v169, %v179
  %v190 = vadd.f32 %v147, %v182
  %v191 = vadd.f32 %v148, %v183
  %v192 = vadd.f32 %v149, %v184
  %v193 = vadd.f32 %v150, %v185
  %v194 = vadd.f32 %v151, %v186
  %v195 = vadd.f32 %v152, %v187
  %v196 = vadd.f32 %v153, %v188
  %v197 = vadd.f32 %v154, %v189
  %v198 = vadd.f32 %v190, %v108
  %v199 = vadd.f32 %v191, %v109
  %v200 = vadd.f32 %v192, %v110
  %v201 = vadd.f32 %v193, %v111
  %v202 = vadd.f32 %v194, %v112
  %v203 = vadd.f32 %v195, %v113
  %v204 = vadd.f32 %v196, %v114
  %v205 = vadd.f32 %v197, %v115
  %v206 = vtanh.pop %v198
  %v207 = vtanh.pop %v199
  %v208 = vtanh.pop %v200
  %v209 = vtanh.pop %v201
  %v210 = vtanh.pop %v202
  %v211 = vtanh.pop %v203
  %v212 = vtanh.pop %v204
  %v213 = vtanh.pop %v205
  %215 = vset.pattern.permute.xlu0 0
  %216 = vperm.xlu0 %215, %v46
  %v217 = vpop.permute.xlu0 %216
  %vm219 = vcmask 261120
  %v221 = vsel %vm219, %v45, 0
  %223 = vmatprep.subr.mxu0 0.0
  %224 = vmatpush1.msra.mxu0 0.0
  %225 = vmatprep.subr.mxu0 0.0
  %226 = vmatpush1.msra.mxu0 0.0
  %227 = vmatprep.subr.mxu0 0.0
  %228 = vmatpush1.msra.mxu0 0.0
  %229 = vmatprep.subr.mxu0 0.0
  %230 = vmatpush1.msra.mxu0 0.0
  %231 = vmatprep.subr.mxu0 0.0
  %232 = vmatpush1.msra.mxu0 0.0
  %233 = vmatprep.subr.mxu0 0.0
  %234 = vmatpush1.msra.mxu0 0.0
  %235 = vmatprep.subr.mxu0 0.0
  %236 = vmatpush1.msra.mxu0 0.0
  %237 = vmatprep.subr.mxu0 0.0
  %238 = vmatpush1.msra.mxu0 0.0
  %239 = vmatprep.subr.mxu0 0.0
  %240 = vmatpush1.msra.mxu0 0.0
  %241 = vmatprep.subr.mxu0 0.0
  %242 = vmatpush1.msra.mxu0 0.0
  %243 = vmatprep.subr.mxu0 0.0
  %244 = vmatpush1.msra.mxu0 0.0
  %245 = vmatprep.subr.mxu0 0.0
  %246 = vmatpush1.msra.mxu0 0.0
  %247 = vmatprep.subr.mxu0 %v213
  %248 = vmatpush1.msra.mxu0 %v212
  %249 = vmatprep.subr.mxu0 %v211
  %250 = vmatpush1.msra.mxu0 %v210
  %251 = vmatprep.subr.mxu0 %v209
  %252 = vmatpush1.msra.mxu0 %v208
  %253 = vmatprep.subr.mxu0 %v207
  %254 = vmatpush1.msra.mxu0 %v206
  %255 = vmatprep.subr.mxu0 0.0
  %256 = vmatpush2.msra.mxu0 0.0
  %257 = vmatprep.subr.mxu0 0.0
  %258 = vmatpush2.msra.mxu0 0.0
  %259 = vmatprep.subr.mxu0 0.0
  %260 = vmatpush2.msra.mxu0 0.0
  %261 = vmatprep.subr.mxu0 0.0
  %262 = vmatpush2.msra.mxu0 0.0
  %263 = vmatprep.subr.mxu0 0.0
  %264 = vmatpush2.msra.mxu0 0.0
  %265 = vmatprep.subr.mxu0 0.0
  %266 = vmatpush2.msra.mxu0 0.0
  %267 = vmatprep.subr.mxu0 0.0
  %268 = vmatpush2.msra.mxu0 0.0
  %269 = vmatprep.subr.mxu0 0.0
  %270 = vmatpush2.msra.mxu0 0.0
  %271 = vmatprep.subr.mxu0 0.0
  %272 = vmatpush2.msra.mxu0 0.0
  %273 = vmatprep.subr.mxu0 0.0
  %274 = vmatpush2.msra.mxu0 0.0
  %275 = vmatprep.subr.mxu0 0.0
  %276 = vmatpush2.msra.mxu0 0.0
  %277 = vmatprep.subr.mxu0 0.0
  %278 = vmatpush2.msra.mxu0 0.0
  %279 = vmatprep.subr.mxu0 0.0
  %280 = vmatpush2.msra.mxu0 0.0
  %281 = vmatprep.subr.mxu0 0.0
  %282 = vmatpush2.msra.mxu0 0.0
  %283 = vmatprep.subr.mxu0 0.0
  %284 = vmatpush2.msra.mxu0 0.0
  %285 = vmatprep.subr.mxu0 0.0
  %286 = vmatpush2.msra.mxu0 0.0
  %287 = vmatprep.mubr.f32.mxu0 0.0
  %288 = vmatmul.mubr.f32.gmra.mxu0 %v221
  %v289 = vpop.f32.mrf.mxu0
  %v290 = vadd.f32 %v217, %v289
  %v291 = vpop.f32.mrf.mxu0
  %v292 = vadd.f32 %v217, %v291
  %293 = vdwg.mxu0
  %v294 = vsub.f32 %v26, 0.025
  %v295 = vmul.f32 %v294, 0.8
  %v296 = vadd.f32 %v295, -1.0
  %v298 = vlaneseq
  %v299 = vshrl.u32 %v298, 7
  %v300 = vsub.s32 0, %v299
  %v301 = vrot.slane %v296, %v300
  %v302 = vlaneseq
  %v303 = vshrl.u32 %v302, 7
  %v304 = vsub.s32 1, %v303
  %v305 = vrot.slane %v296, %v304
  %v308 = vmul.f32 %v122, %v301
  %v309 = vmul.f32 %v122, %v305
  %v310 = vmul.f32 %v126, %v301
  %v311 = vmul.f32 %v126, %v305
  %v312 = vmul.f32 %v130, %v301
  %v313 = vmul.f32 %v130, %v305
  %v314 = vmul.f32 %v134, %v301
  %v315 = vmul.f32 %v134, %v305
  %v316 = vadd.f32 %v308, %v182
  %v317 = vadd.f32 %v309, %v183
  %v318 = vadd.f32 %v310, %v184
  %v319 = vadd.f32 %v311, %v185
  %v320 = vadd.f32 %v312, %v186
  %v321 = vadd.f32 %v313, %v187
  %v322 = vadd.f32 %v314, %v188
  %v323 = vadd.f32 %v315, %v189
  %v324 = vadd.f32 %v316, %v108
  %v325 = vadd.f32 %v317, %v109
  %v326 = vadd.f32 %v318, %v110
  %v327 = vadd.f32 %v319, %v111
  %v328 = vadd.f32 %v320, %v112
  %v329 = vadd.f32 %v321, %v113
  %v330 = vadd.f32 %v322, %v114
  %v331 = vadd.f32 %v323, %v115
  %v332 = vtanh.pop %v324
  %v333 = vtanh.pop %v325
  %v334 = vtanh.pop %v326
  %v335 = vtanh.pop %v327
  %v336 = vtanh.pop %v328
  %v337 = vtanh.pop %v329
  %v338 = vtanh.pop %v330
  %v339 = vtanh.pop %v331
  %340 = vmatprep.subr.mxu0 0.0
  %341 = vmatpush1.msra.mxu0 0.0
  %342 = vmatprep.subr.mxu0 0.0
  %343 = vmatpush1.msra.mxu0 0.0
  %344 = vmatprep.subr.mxu0 0.0
  %345 = vmatpush1.msra.mxu0 0.0
  %346 = vmatprep.subr.mxu0 0.0
  %347 = vmatpush1.msra.mxu0 0.0
  %348 = vmatprep.subr.mxu0 0.0
  %349 = vmatpush1.msra.mxu0 0.0
  %350 = vmatprep.subr.mxu0 0.0
  %351 = vmatpush1.msra.mxu0 0.0
  %352 = vmatprep.subr.mxu0 0.0
  %353 = vmatpush1.msra.mxu0 0.0
  %354 = vmatprep.subr.mxu0 0.0
  %355 = vmatpush1.msra.mxu0 0.0
  %356 = vmatprep.subr.mxu0 0.0
  %357 = vmatpush1.msra.mxu0 0.0
  %358 = vmatprep.subr.mxu0 0.0
  %359 = vmatpush1.msra.mxu0 0.0
  %360 = vmatprep.subr.mxu0 0.0
  %361 = vmatpush1.msra.mxu0 0.0
  %362 = vmatprep.subr.mxu0 0.0
  %363 = vmatpush1.msra.mxu0 0.0
  %364 = vmatprep.subr.mxu0 %v339
  %365 = vmatpush1.msra.mxu0 %v338
  %366 = vmatprep.subr.mxu0 %v337
  %367 = vmatpush1.msra.mxu0 %v336
  %368 = vmatprep.subr.mxu0 %v335
  %369 = vmatpush1.msra.mxu0 %v334
  %370 = vmatprep.subr.mxu0 %v333
  %371 = vmatpush1.msra.mxu0 %v332
  %372 = vmatprep.subr.mxu0 0.0
  %373 = vmatpush2.msra.mxu0 0.0
  %374 = vmatprep.subr.mxu0 0.0
  %375 = vmatpush2.msra.mxu0 0.0
  %376 = vmatprep.subr.mxu0 0.0
  %377 = vmatpush2.msra.mxu0 0.0
  %378 = vmatprep.subr.mxu0 0.0
  %379 = vmatpush2.msra.mxu0 0.0
  %380 = vmatprep.subr.mxu0 0.0
  %381 = vmatpush2.msra.mxu0 0.0
  %382 = vmatprep.subr.mxu0 0.0
  %383 = vmatpush2.msra.mxu0 0.0
  %384 = vmatprep.subr.mxu0 0.0
  %385 = vmatpush2.msra.mxu0 0.0
  %386 = vmatprep.subr.mxu0 0.0
  %387 = vmatpush2.msra.mxu0 0.0
  %388 = vmatprep.subr.mxu0 0.0
  %389 = vmatpush2.msra.mxu0 0.0
  %390 = vmatprep.subr.mxu0 0.0
  %391 = vmatpush2.msra.mxu0 0.0
  %392 = vmatprep.subr.mxu0 0.0
  %393 = vmatpush2.msra.mxu0 0.0
  %394 = vmatprep.subr.mxu0 0.0
  %395 = vmatpush2.msra.mxu0 0.0
  %396 = vmatprep.subr.mxu0 0.0
  %397 = vmatpush2.msra.mxu0 0.0
  %398 = vmatprep.subr.mxu0 0.0
  %399 = vmatpush2.msra.mxu0 0.0
  %400 = vmatprep.subr.mxu0 0.0
  %401 = vmatpush2.msra.mxu0 0.0
  %402 = vmatprep.subr.mxu0 0.0
  %403 = vmatpush2.msra.mxu0 0.0
  %404 = vmatprep.mubr.f32.mxu0 0.0
  %405 = vmatmul.mubr.f32.gmra.mxu0 %v221
  %v406 = vpop.f32.mrf.mxu0
  %v407 = vadd.f32 %v217, %v406
  %v408 = vpop.f32.mrf.mxu0
  %v409 = vadd.f32 %v217, %v408
  %410 = vdwg.mxu0
  %v411 = vadd.f32 %v26, 0.025
  %v412 = vmul.f32 %v411, 0.8
  %v413 = vadd.f32 %v412, -1.0
  %v415 = vlaneseq
  %v416 = vshrl.u32 %v415, 7
  %v417 = vsub.s32 0, %v416
  %v418 = vrot.slane %v413, %v417
  %v419 = vlaneseq
  %v420 = vshrl.u32 %v419, 7
  %v421 = vsub.s32 1, %v420
  %v422 = vrot.slane %v413, %v421
  %v425 = vmul.f32 %v122, %v418
  %v426 = vmul.f32 %v122, %v422
  %v427 = vmul.f32 %v126, %v418
  %v428 = vmul.f32 %v126, %v422
  %v429 = vmul.f32 %v130, %v418
  %v430 = vmul.f32 %v130, %v422
  %v431 = vmul.f32 %v134, %v418
  %v432 = vmul.f32 %v134, %v422
  %v433 = vadd.f32 %v425, %v182
  %v434 = vadd.f32 %v426, %v183
  %v435 = vadd.f32 %v427, %v184
  %v436 = vadd.f32 %v428, %v185
  %v437 = vadd.f32 %v429, %v186
  %v438 = vadd.f32 %v430, %v187
  %v439 = vadd.f32 %v431, %v188
  %v440 = vadd.f32 %v432, %v189
  %v441 = vadd.f32 %v433, %v108
  %v442 = vadd.f32 %v434, %v109
  %v443 = vadd.f32 %v435, %v110
  %v444 = vadd.f32 %v436, %v111
  %v445 = vadd.f32 %v437, %v112
  %v446 = vadd.f32 %v438, %v113
  %v447 = vadd.f32 %v439, %v114
  %v448 = vadd.f32 %v440, %v115
  %v449 = vtanh.pop %v441
  %v450 = vtanh.pop %v442
  %v451 = vtanh.pop %v443
  %v452 = vtanh.pop %v444
  %v453 = vtanh.pop %v445
  %v454 = vtanh.pop %v446
  %v455 = vtanh.pop %v447
  %v456 = vtanh.pop %v448
  %457 = vmatprep.subr.mxu0 0.0
  %458 = vmatpush1.msra.mxu0 0.0
  %459 = vmatprep.subr.mxu0 0.0
  %460 = vmatpush1.msra.mxu0 0.0
  %461 = vmatprep.subr.mxu0 0.0
  %462 = vmatpush1.msra.mxu0 0.0
  %463 = vmatprep.subr.mxu0 0.0
  %464 = vmatpush1.msra.mxu0 0.0
  %465 = vmatprep.subr.mxu0 0.0
  %466 = vmatpush1.msra.mxu0 0.0
  %467 = vmatprep.subr.mxu0 0.0
  %468 = vmatpush1.msra.mxu0 0.0
  %469 = vmatprep.subr.mxu0 0.0
  %470 = vmatpush1.msra.mxu0 0.0
  %471 = vmatprep.subr.mxu0 0.0
  %472 = vmatpush1.msra.mxu0 0.0
  %473 = vmatprep.subr.mxu0 0.0
  %474 = vmatpush1.msra.mxu0 0.0
  %475 = vmatprep.subr.mxu0 0.0
  %476 = vmatpush1.msra.mxu0 0.0
  %477 = vmatprep.subr.mxu0 0.0
  %478 = vmatpush1.msra.mxu0 0.0
  %479 = vmatprep.subr.mxu0 0.0
  %480 = vmatpush1.msra.mxu0 0.0
  %481 = vmatprep.subr.mxu0 %v456
  %482 = vmatpush1.msra.mxu0 %v455
  %483 = vmatprep.subr.mxu0 %v454
  %484 = vmatpush1.msra.mxu0 %v453
  %485 = vmatprep.subr.mxu0 %v452
  %486 = vmatpush1.msra.mxu0 %v451
  %487 = vmatprep.subr.mxu0 %v450
  %488 = vmatpush1.msra.mxu0 %v449
  %489 = vmatprep.subr.mxu0 0.0
  %490 = vmatpush2.msra.mxu0 0.0
  %491 = vmatprep.subr.mxu0 0.0
  %492 = vmatpush2.msra.mxu0 0.0
  %493 = vmatprep.subr.mxu0 0.0
  %494 = vmatpush2.msra.mxu0 0.0
  %495 = vmatprep.subr.mxu0 0.0
  %496 = vmatpush2.msra.mxu0 0.0
  %497 = vmatprep.subr.mxu0 0.0
  %498 = vmatpush2.msra.mxu0 0.0
  %499 = vmatprep.subr.mxu0 0.0
  %500 = vmatpush2.msra.mxu0 0.0
  %501 = vmatprep.subr.mxu0 0.0
  %502 = vmatpush2.msra.mxu0 0.0
  %503 = vmatprep.subr.mxu0 0.0
  %504 = vmatpush2.msra.mxu0 0.0
  %505 = vmatprep.subr.mxu0 0.0
  %506 = vmatpush2.msra.mxu0 0.0
  %507 = vmatprep.subr.mxu0 0.0
  %508 = vmatpush2.msra.mxu0 0.0
  %509 = vmatprep.subr.mxu0 0.0
  %510 = vmatpush2.msra.mxu0 0.0
  %511 = vmatprep.subr.mxu0 0.0
  %512 = vmatpush2.msra.mxu0 0.0
  %513 = vmatprep.subr.mxu0 0.0
  %514 = vmatpush2.msra.mxu0 0.0
  %515 = vmatprep.subr.mxu0 0.0
  %516 = vmatpush2.msra.mxu0 0.0
  %517 = vmatprep.subr.mxu0 0.0
  %518 = vmatpush2.msra.mxu0 0.0
  %519 = vmatprep.subr.mxu0 0.0
  %520 = vmatpush2.msra.mxu0 0.0
  %521 = vmatprep.mubr.f32.mxu0 0.0
  %522 = vmatmul.mubr.f32.gmra.mxu0 %v221
  %v523 = vpop.f32.mrf.mxu0
  %v524 = vadd.f32 %v217, %v523
  %v525 = vpop.f32.mrf.mxu0
  %v526 = vadd.f32 %v217, %v525
  %527 = vdwg.mxu0
  %v528 = vsub.f32 %v28, 0.025
  %v529 = vmul.f32 %v528, 0.8
  %v530 = vadd.f32 %v529, -1.0
  %v532 = vlaneseq
  %v533 = vshrl.u32 %v532, 7
  %v534 = vsub.s32 0, %v533
  %v535 = vrot.slane %v530, %v534
  %v536 = vlaneseq
  %v537 = vshrl.u32 %v536, 7
  %v538 = vsub.s32 1, %v537
  %v539 = vrot.slane %v530, %v538
  %v542 = vmul.f32 %v157, %v535
  %v543 = vmul.f32 %v157, %v539
  %v544 = vmul.f32 %v161, %v535
  %v545 = vmul.f32 %v161, %v539
  %v546 = vmul.f32 %v165, %v535
  %v547 = vmul.f32 %v165, %v539
  %v548 = vmul.f32 %v169, %v535
  %v549 = vmul.f32 %v169, %v539
  %v550 = vadd.f32 %v147, %v542
  %v551 = vadd.f32 %v148, %v543
  %v552 = vadd.f32 %v149, %v544
  %v553 = vadd.f32 %v150, %v545
  %v554 = vadd.f32 %v151, %v546
  %v555 = vadd.f32 %v152, %v547
  %v556 = vadd.f32 %v153, %v548
  %v557 = vadd.f32 %v154, %v549
  %v558 = vadd.f32 %v550, %v108
  %v559 = vadd.f32 %v551, %v109
  %v560 = vadd.f32 %v552, %v110
  %v561 = vadd.f32 %v553, %v111
  %v562 = vadd.f32 %v554, %v112
  %v563 = vadd.f32 %v555, %v113
  %v564 = vadd.f32 %v556, %v114
  %v565 = vadd.f32 %v557, %v115
  %v566 = vtanh.pop %v558
  %v567 = vtanh.pop %v559
  %v568 = vtanh.pop %v560
  %v569 = vtanh.pop %v561
  %v570 = vtanh.pop %v562
  %v571 = vtanh.pop %v563
  %v572 = vtanh.pop %v564
  %v573 = vtanh.pop %v565
  %574 = vmatprep.subr.mxu0 0.0
  %575 = vmatpush1.msra.mxu0 0.0
  %576 = vmatprep.subr.mxu0 0.0
  %577 = vmatpush1.msra.mxu0 0.0
  %578 = vmatprep.subr.mxu0 0.0
  %579 = vmatpush1.msra.mxu0 0.0
  %580 = vmatprep.subr.mxu0 0.0
  %581 = vmatpush1.msra.mxu0 0.0
  %582 = vmatprep.subr.mxu0 0.0
  %583 = vmatpush1.msra.mxu0 0.0
  %584 = vmatprep.subr.mxu0 0.0
  %585 = vmatpush1.msra.mxu0 0.0
  %586 = vmatprep.subr.mxu0 0.0
  %587 = vmatpush1.msra.mxu0 0.0
  %588 = vmatprep.subr.mxu0 0.0
  %589 = vmatpush1.msra.mxu0 0.0
  %590 = vmatprep.subr.mxu0 0.0
  %591 = vmatpush1.msra.mxu0 0.0
  %592 = vmatprep.subr.mxu0 0.0
  %593 = vmatpush1.msra.mxu0 0.0
  %594 = vmatprep.subr.mxu0 0.0
  %595 = vmatpush1.msra.mxu0 0.0
  %596 = vmatprep.subr.mxu0 0.0
  %597 = vmatpush1.msra.mxu0 0.0
  %598 = vmatprep.subr.mxu0 %v573
  %599 = vmatpush1.msra.mxu0 %v572
  %600 = vmatprep.subr.mxu0 %v571
  %601 = vmatpush1.msra.mxu0 %v570
  %602 = vmatprep.subr.mxu0 %v569
  %603 = vmatpush1.msra.mxu0 %v568
  %604 = vmatprep.subr.mxu0 %v567
  %605 = vmatpush1.msra.mxu0 %v566
  %606 = vmatprep.subr.mxu0 0.0
  %607 = vmatpush2.msra.mxu0 0.0
  %608 = vmatprep.subr.mxu0 0.0
  %609 = vmatpush2.msra.mxu0 0.0
  %610 = vmatprep.subr.mxu0 0.0
  %611 = vmatpush2.msra.mxu0 0.0
  %612 = vmatprep.subr.mxu0 0.0
  %613 = vmatpush2.msra.mxu0 0.0
  %614 = vmatprep.subr.mxu0 0.0
  %615 = vmatpush2.msra.mxu0 0.0
  %616 = vmatprep.subr.mxu0 0.0
  %617 = vmatpush2.msra.mxu0 0.0
  %618 = vmatprep.subr.mxu0 0.0
  %619 = vmatpush2.msra.mxu0 0.0
  %620 = vmatprep.subr.mxu0 0.0
  %621 = vmatpush2.msra.mxu0 0.0
  %622 = vmatprep.subr.mxu0 0.0
  %623 = vmatpush2.msra.mxu0 0.0
  %624 = vmatprep.subr.mxu0 0.0
  %625 = vmatpush2.msra.mxu0 0.0
  %626 = vmatprep.subr.mxu0 0.0
  %627 = vmatpush2.msra.mxu0 0.0
  %628 = vmatprep.subr.mxu0 0.0
  %629 = vmatpush2.msra.mxu0 0.0
  %630 = vmatprep.subr.mxu0 0.0
  %631 = vmatpush2.msra.mxu0 0.0
  %632 = vmatprep.subr.mxu0 0.0
  %633 = vmatpush2.msra.mxu0 0.0
  %634 = vmatprep.subr.mxu0 0.0
  %635 = vmatpush2.msra.mxu0 0.0
  %636 = vmatprep.subr.mxu0 0.0
  %637 = vmatpush2.msra.mxu0 0.0
  %638 = vmatprep.mubr.f32.mxu0 0.0
  %639 = vmatmul.mubr.f32.gmra.mxu0 %v221
  %v640 = vpop.f32.mrf.mxu0
  %v641 = vadd.f32 %v217, %v640
  %v642 = vpop.f32.mrf.mxu0
  %v643 = vadd.f32 %v217, %v642
  %644 = vdwg.mxu0
  %v645 = vadd.f32 %v28, 0.025
  %v646 = vmul.f32 %v645, 0.8
  %v647 = vadd.f32 %v646, -1.0
  %v649 = vlaneseq
  %v650 = vshrl.u32 %v649, 7
  %v651 = vsub.s32 0, %v650
  %v652 = vrot.slane %v647, %v651
  %v653 = vlaneseq
  %v654 = vshrl.u32 %v653, 7
  %v655 = vsub.s32 1, %v654
  %v656 = vrot.slane %v647, %v655
  %v659 = vmul.f32 %v157, %v652
  %v660 = vmul.f32 %v157, %v656
  %v661 = vmul.f32 %v161, %v652
  %v662 = vmul.f32 %v161, %v656
  %v663 = vmul.f32 %v165, %v652
  %v664 = vmul.f32 %v165, %v656
  %v665 = vmul.f32 %v169, %v652
  %v666 = vmul.f32 %v169, %v656
  %v667 = vadd.f32 %v147, %v659
  %v668 = vadd.f32 %v148, %v660
  %v669 = vadd.f32 %v149, %v661
  %v670 = vadd.f32 %v150, %v662
  %v671 = vadd.f32 %v151, %v663
  %v672 = vadd.f32 %v152, %v664
  %v673 = vadd.f32 %v153, %v665
  %v674 = vadd.f32 %v154, %v666
  %v675 = vadd.f32 %v667, %v108
  %v676 = vadd.f32 %v668, %v109
  %v677 = vadd.f32 %v669, %v110
  %v678 = vadd.f32 %v670, %v111
  %v679 = vadd.f32 %v671, %v112
  %v680 = vadd.f32 %v672, %v113
  %v681 = vadd.f32 %v673, %v114
  %v682 = vadd.f32 %v674, %v115
  %v683 = vtanh.pop %v675
  %v684 = vtanh.pop %v676
  %v685 = vtanh.pop %v677
  %v686 = vtanh.pop %v678
  %v687 = vtanh.pop %v679
  %v688 = vtanh.pop %v680
  %v689 = vtanh.pop %v681
  %v690 = vtanh.pop %v682
  %691 = vmatprep.subr.mxu0 0.0
  %692 = vmatpush1.msra.mxu0 0.0
  %693 = vmatprep.subr.mxu0 0.0
  %694 = vmatpush1.msra.mxu0 0.0
  %695 = vmatprep.subr.mxu0 0.0
  %696 = vmatpush1.msra.mxu0 0.0
  %697 = vmatprep.subr.mxu0 0.0
  %698 = vmatpush1.msra.mxu0 0.0
  %699 = vmatprep.subr.mxu0 0.0
  %700 = vmatpush1.msra.mxu0 0.0
  %701 = vmatprep.subr.mxu0 0.0
  %702 = vmatpush1.msra.mxu0 0.0
  %703 = vmatprep.subr.mxu0 0.0
  %704 = vmatpush1.msra.mxu0 0.0
  %705 = vmatprep.subr.mxu0 0.0
  %706 = vmatpush1.msra.mxu0 0.0
  %707 = vmatprep.subr.mxu0 0.0
  %708 = vmatpush1.msra.mxu0 0.0
  %709 = vmatprep.subr.mxu0 0.0
  %710 = vmatpush1.msra.mxu0 0.0
  %711 = vmatprep.subr.mxu0 0.0
  %712 = vmatpush1.msra.mxu0 0.0
  %713 = vmatprep.subr.mxu0 0.0
  %714 = vmatpush1.msra.mxu0 0.0
  %715 = vmatprep.subr.mxu0 %v690
  %716 = vmatpush1.msra.mxu0 %v689
  %717 = vmatprep.subr.mxu0 %v688
  %718 = vmatpush1.msra.mxu0 %v687
  %719 = vmatprep.subr.mxu0 %v686
  %720 = vmatpush1.msra.mxu0 %v685
  %721 = vmatprep.subr.mxu0 %v684
  %722 = vmatpush1.msra.mxu0 %v683
  %723 = vmatprep.subr.mxu0 0.0
  %724 = vmatpush2.msra.mxu0 0.0
  %725 = vmatprep.subr.mxu0 0.0
  %726 = vmatpush2.msra.mxu0 0.0
  %727 = vmatprep.subr.mxu0 0.0
  %728 = vmatpush2.msra.mxu0 0.0
  %729 = vmatprep.subr.mxu0 0.0
  %730 = vmatpush2.msra.mxu0 0.0
  %731 = vmatprep.subr.mxu0 0.0
  %732 = vmatpush2.msra.mxu0 0.0
  %733 = vmatprep.subr.mxu0 0.0
  %734 = vmatpush2.msra.mxu0 0.0
  %735 = vmatprep.subr.mxu0 0.0
  %736 = vmatpush2.msra.mxu0 0.0
  %737 = vmatprep.subr.mxu0 0.0
  %738 = vmatpush2.msra.mxu0 0.0
  %739 = vmatprep.subr.mxu0 0.0
  %740 = vmatpush2.msra.mxu0 0.0
  %741 = vmatprep.subr.mxu0 0.0
  %742 = vmatpush2.msra.mxu0 0.0
  %743 = vmatprep.subr.mxu0 0.0
  %744 = vmatpush2.msra.mxu0 0.0
  %745 = vmatprep.subr.mxu0 0.0
  %746 = vmatpush2.msra.mxu0 0.0
  %747 = vmatprep.subr.mxu0 0.0
  %748 = vmatpush2.msra.mxu0 0.0
  %749 = vmatprep.subr.mxu0 0.0
  %750 = vmatpush2.msra.mxu0 0.0
  %751 = vmatprep.subr.mxu0 0.0
  %752 = vmatpush2.msra.mxu0 0.0
  %753 = vmatprep.subr.mxu0 0.0
  %754 = vmatpush2.msra.mxu0 0.0
  %755 = vmatprep.mubr.f32.mxu0 0.0
  %756 = vmatmul.mubr.f32.gmra.mxu0 %v221
  %v757 = vpop.f32.mrf.mxu0
  %v758 = vadd.f32 %v217, %v757
  %v759 = vpop.f32.mrf.mxu0
  %v760 = vadd.f32 %v217, %v759
  %761 = vdwg.mxu0
  %v762 = vadd.f32 %v407, %v524
  %v763 = vadd.f32 %v409, %v526
  %v764 = vmul.f32 %v290, 2.0
  %v765 = vmul.f32 %v292, 2.0
  %v766 = vsub.f32 %v762, %v764
  %v767 = vsub.f32 %v763, %v765
  %v768 = vmul.f32 %v766, 1600.0
  %v769 = vmul.f32 %v767, 1600.0
  %v770 = vadd.f32 %v641, %v758
  %v771 = vadd.f32 %v643, %v760
  %v772 = vsub.f32 %v770, %v764
  %v773 = vsub.f32 %v771, %v765
  %v774 = vmul.f32 %v772, 1600.0
  %v775 = vmul.f32 %v773, 1600.0
  %v776 = vadd.f32 %v768, %v774
  %v777 = vadd.f32 %v769, %v775
  %v778 = vstv %s25
  %v779 = vmul.f32 %v778, %v32
  %v781 = vlaneseq
  %v782 = vshrl.u32 %v781, 7
  %v783 = vsub.s32 0, %v782
  %v784 = vrot.slane %v779, %v783
  %v785 = vlaneseq
  %v786 = vshrl.u32 %v785, 7
  %v787 = vsub.s32 1, %v786
  %v788 = vrot.slane %v779, %v787
  %v791 = vmul.f32 %v784, %v290
  %v792 = vmul.f32 %v788, %v292
  %v793 = vadd.f32 %v791, %v776
  %v794 = vadd.f32 %v792, %v777
  %v795 = vsub.f32 %v32, %v34
  %v796 = vmul.f32 %v778, %v795
  %v798 = vlaneseq
  %v799 = vshrl.u32 %v798, 7
  %v800 = vsub.s32 0, %v799
  %v801 = vrot.slane %v796, %v800
  %v802 = vlaneseq
  %v803 = vshrl.u32 %v802, 7
  %v804 = vsub.s32 1, %v803
  %v805 = vrot.slane %v796, %v804
  %v808 = vmul.f32 %v801, %v35
  %v809 = vmul.f32 %v805, %v36
  %v812 = vrot.slane %v808, 5
  %v813 = vrot.slane %v809, 5
  %v816 = vadd.f32 %v793, %v812
  %v817 = vadd.f32 %v794, %v813
  %v818 = vstv %s24
  %v819 = vrcp.pop %v818
  %s820 = vtos %v819
  %s821 = smul.f32 2.355, %s820
  %s822 = smul.f32 %s821, %s821
  %v823 = vsub.f32 %v30, %v26
  %v824 = vmul.f32 %v823, %v823
  %v825 = vstv %s822
  %v826 = vsub.f32 %v825, %v824
  %v827 = vmul.f32 %v528, %v528
  %v828 = vsub.f32 %v826, %v827
  %v829 = vmax.f32 %v828, 0.0
  %v830 = vmul.f32 %v829, 1e+08
  %v831 = vstv %s24
  %v832 = vmul.f32 %v830, %v831
  %v833 = vmul.f32 %v816, %v816
  %v834 = vmul.f32 %v817, %v817
  %v837 = vrot.slane %v833, 1
  %v838 = vrot.slane %v834, 1
  %v841 = vadd.f32 %v833, %v837
  %v842 = vadd.f32 %v834, %v838
  %v843 = vmul.f32 %v290, %v290
  %v844 = vmul.f32 %v292, %v292
  %v847 = vrot.slane %v843, 1
  %v848 = vrot.slane %v844, 1
  %v851 = vadd.f32 %v843, %v847
  %v852 = vadd.f32 %v844, %v848
  %v855 = vcombine.low %v851, %v852
  %v857 = vunpack.c.l.s4 1966171168
  %v858 = vunpack.c.0.s8 %v857
  %v859 = vlaneseq
  %v860 = vshrl.u32 %v859, 7
  %v861 = vsub.s32 %v858, %v860
  %v862 = vrot.slane %v855, %v861
  %v864 = vunpack.c.l.s4 1966171168
  %v865 = vunpack.c.0.s8 %v864
  %v866 = vlaneseq
  %v867 = vshrl.u32 %v866, 7
  %v868 = vsub.s32 %v865, %v867
  %v869 = vrot.slane %v862, %v868
  %v871 = vmul.f32 %v832, %v869
  %v874 = vcombine.low %v816, %v817
  %876 = vst [vmem:[%s6] sm:$0x33] %v874
  %v879 = vcombine.low %v841, %v842
  %v881 = vunpack.c.l.s4 1966171168
  %v882 = vunpack.c.0.s8 %v881
  %v883 = vlaneseq
  %v884 = vshrl.u32 %v883, 7
  %v885 = vsub.s32 %v882, %v884
  %v886 = vrot.slane %v879, %v885
  %v888 = vunpack.c.l.s4 1966171168
  %v889 = vunpack.c.0.s8 %v888
  %v890 = vlaneseq
  %v891 = vshrl.u32 %v890, 7
  %v892 = vsub.s32 %v889, %v891
  %v893 = vrot.slane %v886, %v892
  %v895 = vlaneseq
  %vm896 = vcmp.ge.s32.totalorder %v895, 0
  %vm897 = vcmp.lt.s32.totalorder %v895, 256
  %vm898 = vmand %vm896, %vm897
  %s899 = scalar_lea.vmem %s6, 2
  %900 = vst.msk [vmem:[%s899] ss:$4 sm:$0x3] %vm898, %v893
  %s901 = scalar_lea.vmem %s6, 3
  %902 = vst.msk [vmem:[%s901] ss:$4 sm:$0x3] %vm898, %v871
  // Predicated region
  $region26: #{helmholtz_forward.1} parent=0 // pred_check
    _
  $region27: #{helmholtz_forward.1} parent=0 // pred_check_branch
    %904 = sbr.rel (0) target = $region29
  $region28: #{helmholtz_forward.1} parent=0 // pred_region
    _
  $region29: #{helmholtz_forward.1} parent=0 // pred_fallthru
    _
  // Predicated region
  $region30: #{helmholtz_forward.1} parent=0 // pred_check
    _
  $region31: #{helmholtz_forward.1} parent=0 // pred_check_branch
    %906 = sbr.rel (0) target = $region33
  $region32: #{helmholtz_forward.1} parent=0 // pred_region
    _
  $region33: #{helmholtz_forward.1} parent=0 // pred_fallthru
    _

</llo_original>
